<compile_context>
chip_gen: v5e
topology: v5e:2x2
jax: 0.10.0
libtpu: 0.0.40
codegen_flags: <defaults>
</compile_context>

<pallas_src>
import jax
import jax.numpy as jnp
from jax.experimental import pallas as pl
from jax.experimental.pallas import tpu as pltpu

NUM_SUBMODULES = 10          # 5 in mods1 + 5 in mods2
_LANES = 128
_BLOCK_ROWS = 4096           # (4096, 128) f32 = 2 MiB per tile
_TARGET_GRID_STEPS = 4       # keep >=2 (ideally 4+) steps so v7x's 2 TCs both stream
_MIN_PALLAS_ROWS = 2048      # ~1 MiB of f32; below this a fused XLA add wins


def _round_up(x, m):
    return ((x + m - 1) // m) * m


def _add_kernel(w_ref, x_ref, o_ref):
    # w_ref: (1, 128) summed+tiled weight row, broadcasts over the tile.
    # x_ref / o_ref: (block_rows, 128) lane-dense tiles of v (aliased in HBM).
    o_ref[...] = x_ref[...] + w_ref[...]


def my_module2_forward(v, weights, *, min_pallas_rows=_MIN_PALLAS_ROWS):
    """v: (N, d) float32, weights: (NUM_SUBMODULES, d) float32.

    Equivalent to applying the 10 SubModule adds sequentially.
    """
    n, d = v.shape
    # Pre-reduce the 10 per-module weights to a single (d,) vector: one add
    # per element instead of 10 (fp32 accumulation-order difference vs the
    # sequential loop is ~1e-7; covered by the reference tolerance below).
    w_sum = jnp.sum(weights, axis=0)

    total = n * d
    rows = total // _LANES
    if (
        total % _LANES != 0      # can't reshape lane-dense
        or _LANES % d != 0       # lane-dense weight tiling would be wrong
        or rows < max(8, min_pallas_rows)  # tiny input: fused XLA add wins
    ):
        return v + w_sum[None, :]

    x2d = v.reshape(rows, _LANES)
    # Tile the summed weight across the 128 lanes so it matches the flattened
    # (..., w0, w1, w0, w1, ...) layout of each lane-dense row.
    w_row = jnp.tile(w_sum, _LANES // d).reshape(1, _LANES)

    # Pick the largest block that still leaves >= _TARGET_GRID_STEPS grid
    # steps (rounded up to the sublane multiple of 8), capped at _BLOCK_ROWS.
    block_rows = min(_BLOCK_ROWS, _round_up(pl.cdiv(rows, _TARGET_GRID_STEPS), 8))
    grid = (pl.cdiv(rows, block_rows),)

    out2d = pl.pallas_call(
        _add_kernel,
        out_shape=jax.ShapeDtypeStruct((rows, _LANES), v.dtype),
        grid_spec=pltpu.PrefetchScalarGridSpec(
            num_scalar_prefetch=0,
            grid=grid,
            in_specs=[
                # Tiny weight row: same block every step (stays VMEM-resident).
                pl.BlockSpec((1, _LANES), lambda i: (0, 0)),
                pl.BlockSpec((block_rows, _LANES), lambda i: (i, 0)),
            ],
            out_specs=pl.BlockSpec((block_rows, _LANES), lambda i: (i, 0)),
        ),
        # Elementwise op: let the output reuse x2d's HBM buffer.
        input_output_aliases={1: 0},
        compiler_params=pltpu.CompilerParams(
            dimension_semantics=("parallel",),
        ),
    )(w_row, x2d)

    return out2d.reshape(n, d)


if __name__ == "__main__":
    key = jax.random.PRNGKey(0)
    k_w, k_x1, k_x2 = jax.random.split(key, 3)

    # Deterministic parameter init: 10 SubModule weights, each of shape (2,),
    # stacked into (10, 2) (stand-in for torch.randn(2) per SubModule).
    weights = jax.random.normal(k_w, (NUM_SUBMODULES, 2), dtype=jnp.float32)

    def reference(x):
        # Sequential adds in the original PyTorch loop order.
        ref = x
        for i in range(NUM_SUBMODULES):
            ref = ref + weights[i][None, :]
        return ref

    # (a) Pallas path at a small test shape: lower the size threshold so the
    #     kernel actually runs. 4096*2 elems -> 64 lane-dense rows ->
    #     (16, 128) blocks, 4 grid steps.
    x_pallas = jax.random.normal(k_x1, (4096, 2), dtype=jnp.float32)
    out_pallas = my_module2_forward(x_pallas, weights, min_pallas_rows=8)
    out_pallas = jax.block_until_ready(out_pallas)
    assert out_pallas.shape == x_pallas.shape
    assert jnp.allclose(out_pallas, reference(x_pallas), atol=1e-5, rtol=1e-5), \
        "Pallas path mismatch vs reference"

    # (b) Default small-input fallback path (single fused XLA add).
    x_small = jax.random.normal(k_x2, (1024, 2), dtype=jnp.float32)
    out_small = jax.block_until_ready(my_module2_forward(x_small, weights))
    assert jnp.allclose(out_small, reference(x_small), atol=1e-5, rtol=1e-5), \
        "fallback path mismatch vs reference"

    print("KERNEL_OK")
</pallas_src>

<mosaic_0001>
module attributes {stable_mosaic.version = 11 : i64} {
  func.func @_add_kernel(%arg0: i32, %arg1: memref<1x128xf32, #tpu.memory_space<vmem>>, %arg2: memref<16x128xf32, #tpu.memory_space<vmem>>, %arg3: memref<16x128xf32, #tpu.memory_space<vmem>>) attributes {dimension_semantics = [#tpu.dimension_semantics<parallel>], iteration_bounds = array<i64: 4>, scalar_prefetch = 0 : i64, scratch_operands = 0 : i64, tpu.core_type = #tpu.core_type<tc>, window_params = [{pipeline_mode = #tpu.pipeline_mode<synchronous>, transform_indices = @transform_0, window_bounds = array<i64: 1, 128>}, {transform_indices = @transform_1, window_bounds = array<i64: 16, 128>}, {transform_indices = @transform_2, window_bounds = array<i64: 16, 128>}]} {
    %c0 = arith.constant 0 : index
    %c0_0 = arith.constant 0 : index
    %0 = vector.load %arg2[%c0, %c0_0] : memref<16x128xf32, #tpu.memory_space<vmem>>, vector<16x128xf32>
    %c0_1 = arith.constant 0 : index
    %c0_2 = arith.constant 0 : index
    %1 = vector.load %arg1[%c0_1, %c0_2] : memref<1x128xf32, #tpu.memory_space<vmem>>, vector<1x128xf32>
    %2 = vector.broadcast %1 : vector<1x128xf32> to vector<16x128xf32>
    %3 = arith.addf %0, %2 : vector<16x128xf32>
    %c0_3 = arith.constant 0 : index
    %c0_4 = arith.constant 0 : index
    %4 = vector.load %arg3[%c0_3, %c0_4] : memref<16x128xf32, #tpu.memory_space<vmem>>, vector<16x128xf32>
    tpu.vector_store %arg3[%c0_3, %c0_4], %3 {strides = array<i32>} : memref<16x128xf32, #tpu.memory_space<vmem>>, vector<16x128xf32>,
    return
  }
  func.func @transform_0(%arg0: i32) -> (i32, i32) {
    %c0_i32 = arith.constant 0 : i32
    %c0_i32_0 = arith.constant 0 : i32
    %c0_i32_1 = arith.constant 0 : i32
    return %c0_i32, %c0_i32_0 : i32, i32
  }
  func.func @transform_1(%arg0: i32) -> (i32, i32) {
    %c0_i32 = arith.constant 0 : i32
    %c0_i32_0 = arith.constant 0 : i32
    return %arg0, %c0_i32 : i32, i32
  }
  func.func @transform_2(%arg0: i32) -> (i32, i32) {
    %c0_i32 = arith.constant 0 : i32
    %c0_i32_0 = arith.constant 0 : i32
    return %arg0, %c0_i32 : i32, i32
  }
}

</mosaic_0001>

<llo_original>
// kernel: tpu_custom_call.1
$region0: #{tpu_custom_call.1}
  #allocation0 [shape = 'u32[]', space=smem, size = 0x4, offset = 0x4, fixed_abs, tag = 'smem constant byte address 0x4 - core index']
  #allocation1 [shape = 'u32[72,128]{1,0:T(1,128)}', space=vmem, size = 0x9000, scoped, tag = 'internal scratch']
  %s0 = inlined_call_operand.vmem [shape: f32[1,128], index: 0, kind: input, shape index: {}]
  %s1 = inlined_call_operand.hbm [shape: f32[64,128], index: 1, kind: input, shape index: {}, may-alias: {1,2}]
  %s2 = inlined_call_operand.hbm [shape: f32[64,128], index: 2, kind: output, shape index: {}, may-alias: {1,2}]
  %s3 = sld [smem:[#allocation0]]
  $region45: #{tpu_custom_call.1} parent=0
    _
  %s5 = ssub.s32 1, %s3
  %s6 = scalar_select 0, %s5, %s3
  $region1: #{tpu_custom_call.1} parent=0
    #allocation2 [shape = 'u8[16384]{0}', space=vmem, size = 0x4000, scoped, tag = 'input window, operand 1']
    #allocation3 [shape = 's32[2]{0}', space=sflag, size = 0x8, scoped, tag = 'scoped memory for tpu_custom_call.1']
    #allocation4 [shape = 's32[2]{0}', space=sflag, size = 0x8, scoped, tag = 'scoped memory for tpu_custom_call.1']
    #allocation5 [shape = 'u8[16384]{0}', space=vmem, size = 0x4000, scoped, tag = 'output window, operand 0']
    %7 = vsyncpa [#allocation3], 0
    %s8 = scalar_lea.sflag [#allocation3], 1
    %9 = vsyncpa %s8, 0
    %10 = vsyncpa [#allocation4], 0
    %s11 = scalar_lea.sflag [#allocation4], 1
    %12 = vsyncpa %s11, 0
    loop: start=0, step=1, limit=6
    $region2: #{tpu_custom_call.1} parent=1 // loop_pre_header
      _
    $region3: #{tpu_custom_call.1} parent=1 // loop_header
      %s14 = sphi 0, %s18
      %p15 = scmp.ge.s32.totalorder %s14, 6
      %s22 = sphi 0, %s22
      %s24 = sphi 0, %s22
      %s25 = sphi 0, %s24
      %s39 = sphi 0, %s25
      %s45 = sphi 0, %s47
      %s48 = sphi 0, %s45
      %s49 = sphi 0, %s48
      %s65 = sphi 0, %s49
      %s71 = sphi 0, %s73
      %s74 = sphi 0, %s71
      %s75 = sphi 0, %s74
      %s91 = sphi 0, %s75
    $region4: #{tpu_custom_call.1} parent=1 // loop_header_branch
      %17 = sbr.rel (%p15) target = $region8
    $region5: #{tpu_custom_call.1} parent=1 // loop_body
      %s19 = ssub.s32 %s14, 1
      %s20 = ssub.s32 %s14, 2
      %s21 = sadd.s32 %s14, 1
      %s23 = sadd.s32 %s22, 1
      %p26 = scmp.eq.s32.totalorder %s14, 3
      %p27 = scmp.ne.s32.totalorder %s22, %s24
      %p28 = scmp.eq.s32.totalorder %s14, 0
      %p29 = por %p27, %p28
      %p30 = scmp.ne.s32.totalorder %s22, %s24
      %p31 = scmp.eq.s32.totalorder %s19, 3
      %p32 = por %p30, %p31
      %p33 = scmp.ne.s32.totalorder %s24, %s25
      %p34 = scmp.eq.s32.totalorder %s19, 0
      %p35 = por %p33, %p34
      %p36 = scmp.ne.s32.totalorder %s24, %s25
      %p37 = scmp.eq.s32.totalorder %s20, 3
      %p38 = por %p36, %p37
      %p40 = scmp.ne.s32.totalorder %s25, %s39
      %p41 = scmp.eq.s32.totalorder %s20, 0
      %p42 = por %p40, %p41
      %s43 = ssub.s32 %s14, %s21
      %p44 = scmp.eq.s32.totalorder %s43, 0
      %s46 = sadd.s32 %s45, 1
      %s47 = scalar_select %p44, %s45, %s46
      %p50 = pneg %p44
      %p51 = scmp.eq.s32.totalorder %s14, 3
      %p52 = por %p50, %p51
      %p53 = scmp.ne.s32.totalorder %s45, %s48
      %p54 = scmp.eq.s32.totalorder %s14, 0
      %p55 = por %p53, %p54
      %p56 = scmp.ne.s32.totalorder %s45, %s48
      %p57 = scmp.eq.s32.totalorder %s19, 3
      %p58 = por %p56, %p57
      %p59 = scmp.ne.s32.totalorder %s48, %s49
      %p60 = scmp.eq.s32.totalorder %s19, 0
      %p61 = por %p59, %p60
      %p62 = scmp.ne.s32.totalorder %s48, %s49
      %p63 = scmp.eq.s32.totalorder %s20, 3
      %p64 = por %p62, %p63
      %p66 = scmp.ne.s32.totalorder %s49, %s65
      %p67 = scmp.eq.s32.totalorder %s20, 0
      %p68 = por %p66, %p67
      %s69 = ssub.s32 %s14, %s21
      %p70 = scmp.eq.s32.totalorder %s69, 0
      %s72 = sadd.s32 %s71, 1
      %s73 = scalar_select %p70, %s71, %s72
      %p76 = pneg %p70
      %p77 = scmp.eq.s32.totalorder %s14, 3
      %p78 = por %p76, %p77
      %p79 = scmp.ne.s32.totalorder %s71, %s74
      %p80 = scmp.eq.s32.totalorder %s14, 0
      %p81 = por %p79, %p80
      %p82 = scmp.ne.s32.totalorder %s71, %s74
      %p83 = scmp.eq.s32.totalorder %s19, 3
      %p84 = por %p82, %p83
      %p85 = scmp.ne.s32.totalorder %s74, %s75
      %p86 = scmp.eq.s32.totalorder %s19, 0
      %p87 = por %p85, %p86
      %p88 = scmp.ne.s32.totalorder %s74, %s75
      %p89 = scmp.eq.s32.totalorder %s20, 3
      %p90 = por %p88, %p89
      %p92 = scmp.ne.s32.totalorder %s75, %s91
      %p93 = scmp.eq.s32.totalorder %s20, 0
      %p94 = por %p92, %p93
      %p95 = scmp.le.s32.totalorder 1, %s14
      %p96 = scmp.lt.s32.totalorder %s14, 5
      %p97 = pnand %p95, %p96
      %p98 = pneg %p97
      // Predicated region
      $region9: #{tpu_custom_call.1} parent=5 // pred_check
        _
      $region10: #{tpu_custom_call.1} parent=5 // pred_check_branch
        %100 = sbr.rel (%p97) target = $region12
      $region11: #{tpu_custom_call.1} parent=5 // pred_region
        %s101 = ssub.s32 %s14, 1
        // Predicated region
        $region13: #{tpu_custom_call.1} parent=11 // pred_check
          %p102 = pneg %p35
        $region14: #{tpu_custom_call.1} parent=11 // pred_check_branch
          %104 = sbr.rel (%p102) target = $region16
        $region15: #{tpu_custom_call.1} parent=11 // pred_region
          _
        $region16: #{tpu_custom_call.1} parent=11 // pred_fallthru
          _
      $region12: #{tpu_custom_call.1} parent=5 // pred_fallthru
        _
      %p105 = scmp.lt.s32.totalorder %s14, 4
      // Predicated region
      $region17: #{tpu_custom_call.1} parent=5 // pred_check
        %p106 = pneg %p105
      $region18: #{tpu_custom_call.1} parent=5 // pred_check_branch
        %108 = sbr.rel (%p106) target = $region20
      $region19: #{tpu_custom_call.1} parent=5 // pred_region
        // Predicated region
        $region21: #{tpu_custom_call.1} parent=19 // pred_check
          %p109 = pneg %p55
        $region22: #{tpu_custom_call.1} parent=19 // pred_check_branch
          %111 = sbr.rel (%p109) target = $region24
        $region23: #{tpu_custom_call.1} parent=19 // pred_region
          %s112 = sand.u32 %s45, 1
          %s113 = scalar_lea.sflag [#allocation3], %s112
          %s114 = sand.u32 %s45, 1
          %s115 = smul.addr %s114, 16
          %s116 = scalar_lea.vmem [#allocation2], %s115
          %s117 = smul.u32 2, %s14
          %119 = vsyncadd %s113, 0
          %s120 = smul.addr %s117, 8
          %s121 = scalar_lea.hbm %s1, %s120
          %s122 = sshll.u32 %s121, 4
          %s123 = int_to_ptr.hbm [resolvable:$true] %s122
          %s124 = sshll.u32 %s116, 4
          %s125 = int_to_ptr.vmem [resolvable:$true] %s124
          %130 = dma.hbm_to_vmem [thread:$0]  %s123, 256, %s125, %s113, 128, 128, 8
        $region24: #{tpu_custom_call.1} parent=19 // pred_fallthru
          _
      $region20: #{tpu_custom_call.1} parent=5 // pred_fallthru
        _
      %p131 = scmp.le.s32.totalorder 1, %s14
      %p132 = scmp.lt.s32.totalorder %s14, 5
      %p133 = pnand %p131, %p132
      %p134 = pneg %p133
      // Predicated region
      $region25: #{tpu_custom_call.1} parent=5 // pred_check
        _
      $region26: #{tpu_custom_call.1} parent=5 // pred_check_branch
        %136 = sbr.rel (%p133) target = $region28
      $region27: #{tpu_custom_call.1} parent=5 // pred_region
        %s137 = ssub.s32 %s14, 1
        %s138 = sand.u32 %s48, 1
        %s139 = scalar_lea.sflag [#allocation3], %s138
        %s140 = sand.u32 %s48, 1
        %s141 = smul.addr %s140, 16
        %s142 = scalar_lea.vmem [#allocation2], %s141
        // Predicated region
        $region29: #{tpu_custom_call.1} parent=27 // pred_check
          %p143 = pneg %p61
        $region30: #{tpu_custom_call.1} parent=27 // pred_check_branch
          %145 = sbr.rel (%p143) target = $region32
        $region31: #{tpu_custom_call.1} parent=27 // pred_region
          %147 = dma.done %s139, 256
        $region32: #{tpu_custom_call.1} parent=27 // pred_fallthru
          _
        %p148 = pneg %p35
        %p149 = pneg %p32
        %s150 = sand.u32 %s48, 1
        %s151 = scalar_lea.sflag [#allocation3], %s150
        %s152 = sand.u32 %s48, 1
        %s153 = smul.addr %s152, 16
        %s154 = scalar_lea.vmem [#allocation2], %s153
        %p155 = pneg %p61
        %p156 = pneg %p58
        %p157 = pneg %p87
        %p158 = pneg %p84
        %s159 = sand.u32 %s74, 1
        %s160 = scalar_lea.sflag [#allocation4], %s159
        %s161 = sand.u32 %s74, 1
        %s162 = smul.addr %s161, 16
        %s163 = scalar_lea.vmem [#allocation5], %s162
        %s164 = smul.u32 2, %s19
        %s165 = smul.u32 2, %s19
        %v166 = vld [vmem:[%s142] sm:$0xff]
        %v167 = vld [vmem:[%s142 + $0x8] sm:$0xff]
        %v168 = vld [vmem:[%s0] sm:$0x1]
        %v170 = vperm.slane %v168, 0
        %v172 = vadd.f32 %v166, %v170
        %v173 = vadd.f32 %v167, %v170
        %174 = vst [vmem:[%s163] sm:$0xff] %v172
        %175 = vst [vmem:[%s163 + $0x8] sm:$0xff] %v173
        %s176 = sand.u32 %s74, 1
        %s177 = scalar_lea.sflag [#allocation4], %s176
        %s178 = sand.u32 %s74, 1
        %s179 = smul.addr %s178, 16
        %s180 = scalar_lea.vmem [#allocation5], %s179
        // Predicated region
        $region33: #{tpu_custom_call.1} parent=27 // pred_check
          %p181 = pneg %p84
        $region34: #{tpu_custom_call.1} parent=27 // pred_check_branch
          %183 = sbr.rel (%p181) target = $region36
        $region35: #{tpu_custom_call.1} parent=27 // pred_region
          %s184 = smul.u32 2, %s19
          %186 = vsyncadd %s177, 0
          %s187 = smul.addr %s184, 8
          %s188 = scalar_lea.hbm %s2, %s187
          %s189 = sshll.u32 %s180, 4
          %s190 = int_to_ptr.vmem [resolvable:$true] %s189
          %s191 = sshll.u32 %s188, 4
          %s192 = int_to_ptr.hbm [resolvable:$true] %s191
          %197 = dma.vmem_to_hbm [thread:$0]  %s190, 256, %s192, %s177, 128, 128, 8
        $region36: #{tpu_custom_call.1} parent=27 // pred_fallthru
          _
      $region28: #{tpu_custom_call.1} parent=5 // pred_fallthru
        _
      %p198 = scmp.le.s32.totalorder 2, %s14
      // Predicated region
      $region37: #{tpu_custom_call.1} parent=5 // pred_check
        %p199 = pneg %p198
      $region38: #{tpu_custom_call.1} parent=5 // pred_check_branch
        %201 = sbr.rel (%p199) target = $region40
      $region39: #{tpu_custom_call.1} parent=5 // pred_region
        %s202 = ssub.s32 %s14, 2
        // Predicated region
        $region41: #{tpu_custom_call.1} parent=39 // pred_check
          %p203 = pneg %p90
        $region42: #{tpu_custom_call.1} parent=39 // pred_check_branch
          %205 = sbr.rel (%p203) target = $region44
        $region43: #{tpu_custom_call.1} parent=39 // pred_region
          %s206 = sand.u32 %s75, 1
          %s207 = scalar_lea.sflag [#allocation4], %s206
          %s208 = sand.u32 %s75, 1
          %s209 = smul.addr %s208, 16
          %s210 = scalar_lea.vmem [#allocation5], %s209
          %212 = dma.done %s207, 256
        $region44: #{tpu_custom_call.1} parent=39 // pred_fallthru
          _
      $region40: #{tpu_custom_call.1} parent=5 // pred_fallthru
        _
    $region6: #{tpu_custom_call.1} parent=1 // loop_footer
      %s18 = sadd.s32 1, %s14
    $region7: #{tpu_custom_call.1} parent=1 // loop_footer_branch
      %13 = sbr.rel target = $region3
    $region8: #{tpu_custom_call.1} parent=1 // loop_exit
      _
    %213 = vsyncpa [#allocation3], 1
    %s214 = scalar_lea.sflag [#allocation3], 1
    %215 = vsyncpa %s214, 1
    %216 = vsyncpa [#allocation4], 1
    %s217 = scalar_lea.sflag [#allocation4], 1
    %218 = vsyncpa %s217, 1

</llo_original>
